<compile_context>
chip_gen: v6e
topology: v6e:2x2x1
jax: 0.10.0
libtpu: 0.0.40
codegen_flags: <defaults>
</compile_context>

<pallas_src>
import functools

import jax
import jax.numpy as jnp
from jax.experimental import pallas as pl
from jax.experimental.pallas import tpu as pltpu

_LANES = 128
_MAX_ROWS_TILE = 8192          # 8192 * 128 * 4 B = 4 MiB per f32 input block


def _vmem_limit_bytes():
    """Scoped-VMEM budget: generous, but below physical on every generation."""
    try:
        cap = int(getattr(pltpu.get_tpu_info(), "vmem_capacity_bytes"))
    except Exception:
        cap = 64 << 20         # assume the smallest generation (v7x: 64 MiB/TC)
    # 2 inputs x 2 buffers x 4 MiB = 16 MiB pipelined + a few block-sized f32
    # intermediates in the body; leave >= 16 MiB headroom below physical.
    return max(32 << 20, min(cap - (16 << 20), 64 << 20))


def _dice_kernel(pred_ref, targ_ref, out_ref, inter_acc, denom_acc, *,
                 smooth, power, rows_last, edge_mask):
    k = pl.program_id(1)
    kt = pl.num_programs(1)
    b_tile, rows_tile, lanes = pred_ref.shape

    @pl.when(k == 0)
    def _():
        inter_acc[...] = jnp.zeros_like(inter_acc)
        denom_acc[...] = jnp.zeros_like(denom_acc)

    # Cast per tile; inputs stream at their native width (bf16/int8 OK).
    p = pred_ref[...].astype(jnp.float32)
    t = targ_ref[...].astype(jnp.float32)

    def _pow(x):
        if power == 1:
            return x
        if isinstance(power, int) and power > 1:
            # Unrolled multiplies (exponentiation by squaring): stays on the
            # 4 VALU slots instead of exp/log on the single EUP slot.
            result, base, e = None, x, power
            while e:
                if e & 1:
                    result = base if result is None else result * base
                e >>= 1
                if e:
                    base = base * base
            return result
        return x ** power      # non-integer power: EUP path (rare)

    def _accumulate(pv, tv):
        # Lane-wide partial sums only; the cross-lane reduce happens once per
        # sample, on the last row tile.  Summing pv and tv separately for
        # power == 1 avoids another full-block intermediate.
        inter_acc[...] += jnp.sum(pv * tv, axis=1, keepdims=True)
        if power == 1:
            denom_acc[...] += (jnp.sum(pv, axis=1, keepdims=True)
                               + jnp.sum(tv, axis=1, keepdims=True))
        else:
            denom_acc[...] += (jnp.sum(_pow(pv), axis=1, keepdims=True)
                               + jnp.sum(_pow(tv), axis=1, keepdims=True))

    if edge_mask:
        # Only the final row tile overruns the physical array (undefined data
        # beyond `rows_last` rows).  Mask whole rows against a *static*
        # threshold, and only on that tile — zero per-tile VALU cost elsewhere
        # and no int32 flat-index overflow.  Zero lane padding inside valid
        # rows contributes 0 for any power >= 1, so no lane-level mask needed.
        @pl.when(k < kt - 1)
        def _():
            _accumulate(p, t)

        @pl.when(k == kt - 1)
        def _():
            row = jax.lax.broadcasted_iota(jnp.int32, (b_tile, rows_tile, lanes), 1)
            valid = row < rows_last
            _accumulate(jnp.where(valid, p, 0.0), jnp.where(valid, t, 0.0))
    else:
        _accumulate(p, t)

    @pl.when(k == kt - 1)
    def _():
        inter = jnp.sum(inter_acc[...], axis=(1, 2), keepdims=True)  # (b_tile,1,1)
        denom = jnp.sum(denom_acc[...], axis=(1, 2), keepdims=True)
        dice = 1.0 - (2.0 * inter + smooth) / (denom + smooth)
        out_ref[...] = jnp.broadcast_to(dice, out_ref.shape).astype(out_ref.dtype)


def dice_loss(pred, target, weight_mask=None, *, reduce=True, smooth=100.0,
              power=1, max_rows_tile=_MAX_ROWS_TILE):
    """Pallas implementation of DiceLoss.forward.

    reduce=True  -> per-sample dice, averaged over batch (dice_loss).
    reduce=False -> single dice over the whole flattened batch (dice_loss_batch).
    weight_mask is accepted (as in the PyTorch module) but unused.
    """
    del weight_mask  # accepted by the torch forward but never used
    if pred.shape != target.shape:
        raise ValueError(
            "Target size ({}) must be the same as pred size ({})".format(
                target.shape, pred.shape))

    batch = int(pred.shape[0])
    per_sample = 1
    for d in pred.shape[1:]:
        per_sample *= int(d)

    if reduce:
        nb, n = batch, per_sample
    else:
        nb, n = 1, batch * per_sample

    rows = -(-n // _LANES)              # cdiv(n, 128)
    if rows <= max_rows_tile:
        rows_tile, kt = rows, 1         # full-dim row block (need not be %8)
    else:
        rows_tile = max_rows_tile       # multiple of 8 -> tileable
        kt = -(-rows // rows_tile)
    rows_last = rows - (kt - 1) * rows_tile
    edge_mask = (kt > 1) and (rows_last != rows_tile)

    # Pack several small samples per block to amortize the ~0.35 us grid-step
    # cost, but keep >= 2 batch blocks whenever nb >= 2 so both TensorCores
    # get work on v7x.
    if kt == 1:
        pack = max(1, max_rows_tile // max(rows, 1))
        b_tile = max(1, min(nb, pack, -(-nb // 2)))
    else:
        b_tile = 1
    nbt = -(-nb // b_tile)
    # NOTE: when nb % b_tile != 0 the last batch block reads undefined batch
    # rows; the dice values computed for them land in out-of-bounds output
    # rows that Pallas discards, so this is benign.  Do not turn out_ref into
    # an accumulator without revisiting this.
    # TODO(synk): on v7x, when nbt == 1 (reduce=False or a single huge
    # sample), split the row axis into a leading size-2 "parallel" axis that
    # emits partial (inter, denom) sums combined in the wrapper, so the second
    # TensorCore is not idle.

    def prep(x):
        x = x.reshape(nb, n)
        pad = rows * _LANES - n         # < 128 per sample; 0 when n % 128 == 0
        if pad:
            x = jnp.pad(x, ((0, 0), (0, pad)))   # dtype preserved, no upcast
        return x.reshape(nb, rows, _LANES)

    p = prep(pred)
    t = prep(target)

    kernel = functools.partial(
        _dice_kernel, smooth=float(smooth), power=power, rows_last=rows_last,
        edge_mask=edge_mask)

    per_sample_dice = pl.pallas_call(
        kernel,
        out_shape=jax.ShapeDtypeStruct((nb, 1, _LANES), jnp.float32),
        grid=(nbt, kt),
        in_specs=[
            pl.BlockSpec((b_tile, rows_tile, _LANES), lambda b, k: (b, k, 0)),
            pl.BlockSpec((b_tile, rows_tile, _LANES), lambda b, k: (b, k, 0)),
        ],
        out_specs=pl.BlockSpec((b_tile, 1, _LANES), lambda b, k: (b, 0, 0)),
        scratch_shapes=[
            pltpu.VMEM((b_tile, 1, _LANES), jnp.float32),
            pltpu.VMEM((b_tile, 1, _LANES), jnp.float32),
        ],
        compiler_params=pltpu.CompilerParams(
            dimension_semantics=("parallel", "arbitrary"),
            vmem_limit_bytes=_vmem_limit_bytes()),
    )(p, t)

    dice = per_sample_dice[:, 0, 0]          # (nb,)
    if reduce:
        return jnp.sum(dice) / float(batch)  # matches torch: sum then / B
    return dice[0]


def _dice_loss_ref(pred, target, *, reduce=True, smooth=100.0, power=1):
    """Pure-JAX reference mirroring the PyTorch module."""
    pred = pred.astype(jnp.float32)
    target = target.astype(jnp.float32)
    if reduce:
        B = pred.shape[0]
        pf = pred.reshape(B, -1)
        tf = target.reshape(B, -1)
        inter = jnp.sum(pf * tf, axis=1)
        if power == 1:
            denom = jnp.sum(pf, axis=1) + jnp.sum(tf, axis=1)
        else:
            denom = jnp.sum(pf ** power, axis=1) + jnp.sum(tf ** power, axis=1)
        per = 1.0 - (2.0 * inter + smooth) / (denom + smooth)
        return jnp.sum(per) / float(B)
    else:
        pf = pred.reshape(-1)
        tf = target.reshape(-1)
        inter = jnp.sum(pf * tf)
        if power == 1:
            denom = jnp.sum(pf) + jnp.sum(tf)
        else:
            denom = jnp.sum(pf ** power) + jnp.sum(tf ** power)
        return 1.0 - (2.0 * inter + smooth) / (denom + smooth)


def _check(pred, target, **kw):
    ref_kw = {k: v for k, v in kw.items() if k != "max_rows_tile"}
    got = jax.block_until_ready(dice_loss(pred, target, **kw))
    ref = _dice_loss_ref(pred, target, **ref_kw)
    assert jnp.allclose(got, ref, atol=1e-5, rtol=1e-4), (kw, got, ref)


if __name__ == "__main__":
    key = jax.random.PRNGKey(0)
    k1, k2, k3, k4 = jax.random.split(key, 4)

    # Small NCHW shapes consistent with a segmentation loss: (B=2, C=4, 16, 16)
    pred = jax.nn.sigmoid(jax.random.normal(k1, (2, 4, 16, 16), dtype=jnp.float32))
    target = (jax.random.uniform(k2, (2, 4, 16, 16)) > 0.5).astype(jnp.float32)

    # Default module config: reduce=True, smooth=100.0, power=1
    _check(pred, target, reduce=True, smooth=100.0, power=1)
    # reduce=False (whole-batch dice) path.
    _check(pred, target, reduce=False, smooth=100.0, power=1)
    # power=2 and power=3 (integer fast-path: unrolled multiplies).
    _check(pred, target, reduce=True, smooth=1.0, power=2)
    _check(pred, target, reduce=True, smooth=1.0, power=3)

    # bf16 inputs stream at half the HBM traffic; cast happens in-kernel.
    _check(pred.astype(jnp.bfloat16), target.astype(jnp.bfloat16),
           reduce=True, smooth=100.0, power=1)

    # Unaligned spatial dims: exercises minimal 128-multiple tail padding.
    pred_u = jax.nn.sigmoid(jax.random.normal(k3, (2, 3, 37, 43), dtype=jnp.float32))
    target_u = (jax.random.uniform(k4, (2, 3, 37, 43)) > 0.5).astype(jnp.float32)
    _check(pred_u, target_u, reduce=True, smooth=100.0, power=1)

    # Force the row-tiled path (kt > 1) with a ragged edge tile at small
    # shapes via the tile-size override: 128-aligned and unaligned variants.
    _check(pred_u, target_u, reduce=True, smooth=100.0, power=1, max_rows_tile=16)
    pred_t = jax.nn.sigmoid(jax.random.normal(k3, (2, 4, 48, 52), dtype=jnp.float32))
    target_t = (jax.random.uniform(k4, (2, 4, 48, 52)) > 0.5).astype(jnp.float32)
    _check(pred_t, target_t, reduce=True, smooth=100.0, power=1, max_rows_tile=32)
    _check(pred_t, target_t, reduce=False, smooth=100.0, power=1, max_rows_tile=32)

    print("KERNEL_OK")
</pallas_src>

<mosaic_0001>
module attributes {stable_mosaic.version = 11 : i64} {
  func.func @_dice_kernel(%arg0: i32, %arg1: i32, %arg2: memref<1x8x128xf32, #tpu.memory_space<vmem>>, %arg3: memref<1x8x128xf32, #tpu.memory_space<vmem>>, %arg4: memref<1x1x128xf32, #tpu.memory_space<vmem>>, %arg5: memref<1x1x128xf32, #tpu.memory_space<vmem>>, %arg6: memref<1x1x128xf32, #tpu.memory_space<vmem>>) attributes {dimension_semantics = [#tpu.dimension_semantics<parallel>, #tpu.dimension_semantics<arbitrary>], iteration_bounds = array<i64: 2, 1>, scalar_prefetch = 0 : i64, scratch_operands = 2 : i64, tpu.core_type = #tpu.core_type<tc>, window_params = [{transform_indices = @transform_0, window_bounds = array<i64: 1, 8, 128>}, {transform_indices = @transform_1, window_bounds = array<i64: 1, 8, 128>}, {transform_indices = @transform_2, window_bounds = array<i64: 1, 1, 128>}]} {
    %c0_i32 = arith.constant 0 : i32
    %0 = arith.cmpi eq, %arg1, %c0_i32 : i32
    %1 = arith.extui %0 : i1 to i32
    %c0_i32_0 = arith.constant 0 : i32
    %2 = arith.cmpi ne, %1, %c0_i32_0 : i32
    scf.if %2 {
      %cst_22 = arith.constant 0.000000e+00 : f32
      %22 = vector.broadcast %cst_22 : f32 to vector<1x1x128xf32>
      %c0_23 = arith.constant 0 : index
      %c0_24 = arith.constant 0 : index
      %c0_25 = arith.constant 0 : index
      %23 = vector.load %arg5[%c0_23, %c0_24, %c0_25] : memref<1x1x128xf32, #tpu.memory_space<vmem>>, vector<1x1x128xf32>
      tpu.vector_store %arg5[%c0_23, %c0_24, %c0_25], %22 {strides = array<i32>} : memref<1x1x128xf32, #tpu.memory_space<vmem>>, vector<1x1x128xf32>,
      %cst_26 = arith.constant 0.000000e+00 : f32
      %24 = vector.broadcast %cst_26 : f32 to vector<1x1x128xf32>
      %c0_27 = arith.constant 0 : index
      %c0_28 = arith.constant 0 : index
      %c0_29 = arith.constant 0 : index
      %25 = vector.load %arg6[%c0_27, %c0_28, %c0_29] : memref<1x1x128xf32, #tpu.memory_space<vmem>>, vector<1x1x128xf32>
      tpu.vector_store %arg6[%c0_27, %c0_28, %c0_29], %24 {strides = array<i32>} : memref<1x1x128xf32, #tpu.memory_space<vmem>>, vector<1x1x128xf32>,
    } else {
    }
    %c0 = arith.constant 0 : index
    %c0_1 = arith.constant 0 : index
    %c0_2 = arith.constant 0 : index
    %3 = vector.load %arg2[%c0, %c0_1, %c0_2] : memref<1x8x128xf32, #tpu.memory_space<vmem>>, vector<1x8x128xf32>
    %c0_3 = arith.constant 0 : index
    %c0_4 = arith.constant 0 : index
    %c0_5 = arith.constant 0 : index
    %4 = vector.load %arg3[%c0_3, %c0_4, %c0_5] : memref<1x8x128xf32, #tpu.memory_space<vmem>>, vector<1x8x128xf32>
    %c0_6 = arith.constant 0 : index
    %c0_7 = arith.constant 0 : index
    %c0_8 = arith.constant 0 : index
    %5 = vector.load %arg5[%c0_6, %c0_7, %c0_8] : memref<1x1x128xf32, #tpu.memory_space<vmem>>, vector<1x1x128xf32>
    %6 = arith.mulf %3, %4 : vector<1x8x128xf32>
    %cst = arith.constant dense<0.000000e+00> : vector<1x128xf32>
    %7 = vector.multi_reduction <add>, %6, %cst [1] : vector<1x8x128xf32> to vector<1x128xf32>
    %8 = vector.shape_cast %7 : vector<1x128xf32> to vector<1x1x128xf32>
    %9 = arith.addf %5, %8 : vector<1x1x128xf32>
    %c0_9 = arith.constant 0 : index
    %c0_10 = arith.constant 0 : index
    %c0_11 = arith.constant 0 : index
    %10 = vector.load %arg5[%c0_9, %c0_10, %c0_11] : memref<1x1x128xf32, #tpu.memory_space<vmem>>, vector<1x1x128xf32>
    tpu.vector_store %arg5[%c0_9, %c0_10, %c0_11], %9 {strides = array<i32>} : memref<1x1x128xf32, #tpu.memory_space<vmem>>, vector<1x1x128xf32>,
    %c0_12 = arith.constant 0 : index
    %c0_13 = arith.constant 0 : index
    %c0_14 = arith.constant 0 : index
    %11 = vector.load %arg6[%c0_12, %c0_13, %c0_14] : memref<1x1x128xf32, #tpu.memory_space<vmem>>, vector<1x1x128xf32>
    %cst_15 = arith.constant dense<0.000000e+00> : vector<1x128xf32>
    %12 = vector.multi_reduction <add>, %3, %cst_15 [1] : vector<1x8x128xf32> to vector<1x128xf32>
    %13 = vector.shape_cast %12 : vector<1x128xf32> to vector<1x1x128xf32>
    %cst_16 = arith.constant dense<0.000000e+00> : vector<1x128xf32>
    %14 = vector.multi_reduction <add>, %4, %cst_16 [1] : vector<1x8x128xf32> to vector<1x128xf32>
    %15 = vector.shape_cast %14 : vector<1x128xf32> to vector<1x1x128xf32>
    %16 = arith.addf %13, %15 : vector<1x1x128xf32>
    %17 = arith.addf %11, %16 : vector<1x1x128xf32>
    %c0_17 = arith.constant 0 : index
    %c0_18 = arith.constant 0 : index
    %c0_19 = arith.constant 0 : index
    %18 = vector.load %arg6[%c0_17, %c0_18, %c0_19] : memref<1x1x128xf32, #tpu.memory_space<vmem>>, vector<1x1x128xf32>
    tpu.vector_store %arg6[%c0_17, %c0_18, %c0_19], %17 {strides = array<i32>} : memref<1x1x128xf32, #tpu.memory_space<vmem>>, vector<1x1x128xf32>,
    %c0_i32_20 = arith.constant 0 : i32
    %19 = arith.cmpi eq, %arg1, %c0_i32_20 : i32
    %20 = arith.extui %19 : i1 to i32
    %c0_i32_21 = arith.constant 0 : i32
    %21 = arith.cmpi ne, %20, %c0_i32_21 : i32
    scf.if %21 {
      %c0_22 = arith.constant 0 : index
      %c0_23 = arith.constant 0 : index
      %c0_24 = arith.constant 0 : index
      %22 = vector.load %arg5[%c0_22, %c0_23, %c0_24] : memref<1x1x128xf32, #tpu.memory_space<vmem>>, vector<1x1x128xf32>
      %cst_25 = arith.constant dense<0.000000e+00> : vector<1xf32>
      %23 = vector.multi_reduction <add>, %22, %cst_25 [1, 2] : vector<1x1x128xf32> to vector<1xf32>
      %24 = vector.shape_cast %23 : vector<1xf32> to vector<1x1x1xf32>
      %c0_26 = arith.constant 0 : index
      %c0_27 = arith.constant 0 : index
      %c0_28 = arith.constant 0 : index
      %25 = vector.load %arg6[%c0_26, %c0_27, %c0_28] : memref<1x1x128xf32, #tpu.memory_space<vmem>>, vector<1x1x128xf32>
      %cst_29 = arith.constant dense<0.000000e+00> : vector<1xf32>
      %26 = vector.multi_reduction <add>, %25, %cst_29 [1, 2] : vector<1x1x128xf32> to vector<1xf32>
      %27 = vector.shape_cast %26 : vector<1xf32> to vector<1x1x1xf32>
      %cst_30 = arith.constant 2.000000e+00 : f32
      %28 = vector.broadcast %cst_30 : f32 to vector<1x1x1xf32>
      %29 = arith.mulf %28, %24 : vector<1x1x1xf32>
      %cst_31 = arith.constant 1.000000e+02 : f32
      %30 = vector.broadcast %cst_31 : f32 to vector<1x1x1xf32>
      %31 = arith.addf %29, %30 : vector<1x1x1xf32>
      %cst_32 = arith.constant 1.000000e+02 : f32
      %32 = vector.broadcast %cst_32 : f32 to vector<1x1x1xf32>
      %33 = arith.addf %27, %32 : vector<1x1x1xf32>
      %34 = arith.divf %31, %33 : vector<1x1x1xf32>
      %cst_33 = arith.constant 1.000000e+00 : f32
      %35 = vector.broadcast %cst_33 : f32 to vector<1x1x1xf32>
      %36 = arith.subf %35, %34 : vector<1x1x1xf32>
      %37 = vector.shape_cast %36 : vector<1x1x1xf32> to vector<1x1x1xf32>
      %38 = vector.broadcast %37 : vector<1x1x1xf32> to vector<1x1x128xf32>
      %c0_34 = arith.constant 0 : index
      %c0_35 = arith.constant 0 : index
      %c0_36 = arith.constant 0 : index
      %39 = vector.load %arg4[%c0_34, %c0_35, %c0_36] : memref<1x1x128xf32, #tpu.memory_space<vmem>>, vector<1x1x128xf32>
      tpu.vector_store %arg4[%c0_34, %c0_35, %c0_36], %38 {strides = array<i32>} : memref<1x1x128xf32, #tpu.memory_space<vmem>>, vector<1x1x128xf32>,
    } else {
    }
    return
  }
  func.func @transform_0(%arg0: i32, %arg1: i32) -> (i32, i32, i32) {
    %c0_i32 = arith.constant 0 : i32
    %c0_i32_0 = arith.constant 0 : i32
    return %arg0, %arg1, %c0_i32 : i32, i32, i32
  }
  func.func @transform_1(%arg0: i32, %arg1: i32) -> (i32, i32, i32) {
    %c0_i32 = arith.constant 0 : i32
    %c0_i32_0 = arith.constant 0 : i32
    return %arg0, %arg1, %c0_i32 : i32, i32, i32
  }
  func.func @transform_2(%arg0: i32, %arg1: i32) -> (i32, i32, i32) {
    %c0_i32 = arith.constant 0 : i32
    %c0_i32_0 = arith.constant 0 : i32
    %c0_i32_1 = arith.constant 0 : i32
    return %arg0, %c0_i32, %c0_i32_0 : i32, i32, i32
  }
}

</mosaic_0001>

<llo_original>
// kernel: tpu_custom_call.1
$region0: #{tpu_custom_call.1}
  #allocation0 [shape = 'u32[]', space=smem, size = 0x4, offset = 0x4, fixed_abs, tag = 'smem constant byte address 0x4 - core index']
  #allocation1 [shape = 'u32[144,128]{1,0:T(1,128)}', space=vmem, size = 0x12000, scoped, tag = 'internal scratch']
  #allocation2 [shape = 'f32[1,1,128]{2,1,0:T(1,128)}', space=vmem, size = 0x200, scoped, tag = 'scratch operand']
  #allocation3 [shape = 'f32[1,1,128]{2,1,0:T(1,128)}', space=vmem, size = 0x200, scoped, tag = 'scratch operand']
  %s0 = inlined_call_operand.hbm [shape: f32[2,8,128], index: 0, kind: input, shape index: {}]
  %s1 = inlined_call_operand.hbm [shape: f32[2,8,128], index: 1, kind: input, shape index: {}]
  %s2 = inlined_call_operand.hbm [shape: f32[2,1,128], index: 2, kind: output, shape index: {}]
  %s3 = sld [smem:[#allocation0]]
  $region57: #{tpu_custom_call.1} parent=0
    _
  %s5 = ssub.s32 1, %s3
  %s6 = scalar_select 0, %s5, %s3
  $region1: #{tpu_custom_call.1} parent=0
    #allocation4 [shape = 'u8[8192]{0}', space=vmem, size = 0x2000, scoped, tag = 'input window, operand 0']
    #allocation5 [shape = 's32[2]{0}', space=sflag, size = 0x8, scoped, tag = 'scoped memory for tpu_custom_call.1']
    #allocation6 [shape = 's32[2]{0}', space=sflag, size = 0x8, scoped, tag = 'scoped memory for tpu_custom_call.1']
    #allocation7 [shape = 'u8[8192]{0}', space=vmem, size = 0x2000, scoped, tag = 'input window, operand 1']
    #allocation8 [shape = 's32[2]{0}', space=sflag, size = 0x8, scoped, tag = 'scoped memory for tpu_custom_call.1']
    #allocation9 [shape = 'u8[1024]{0}', space=vmem, size = 0x400, scoped, tag = 'output window, operand 0']
    %7 = vsyncpa [#allocation5], 0
    %s8 = scalar_lea.sflag [#allocation5], 1
    %9 = vsyncpa %s8, 0
    %10 = vsyncpa [#allocation8], 0
    %s11 = scalar_lea.sflag [#allocation8], 1
    %12 = vsyncpa %s11, 0
    %13 = vsyncpa [#allocation6], 0
    %s14 = scalar_lea.sflag [#allocation6], 1
    %15 = vsyncpa %s14, 0
    loop: start=0, step=1, limit=4
    $region2: #{tpu_custom_call.1} parent=1 // loop_pre_header
      _
    $region3: #{tpu_custom_call.1} parent=1 // loop_header
      %s17 = sphi 0, %s21
      %p18 = scmp.ge.s32.totalorder %s17, 4
      %s24 = sphi 0, %s36
      %s25 = sphi 0, %s32
      %s26 = sphi 0, %s24
      %s27 = sphi 0, %s25
      %s28 = sphi 0, %s26
      %s29 = sphi 0, %s27
      %s41 = sphi 0, %s43
      %s44 = sphi 0, %s41
      %s45 = sphi 0, %s44
      %s61 = sphi 0, %s45
      %s69 = sphi 0, %s71
      %s72 = sphi 0, %s69
      %s73 = sphi 0, %s72
      %s89 = sphi 0, %s73
      %s95 = sphi 0, %s97
      %s98 = sphi 0, %s95
      %s99 = sphi 0, %s98
      %s115 = sphi 0, %s99
    $region4: #{tpu_custom_call.1} parent=1 // loop_header_branch
      %20 = sbr.rel (%p18) target = $region8
    $region5: #{tpu_custom_call.1} parent=1 // loop_body
      %s22 = ssub.s32 %s17, 1
      %s23 = ssub.s32 %s17, 2
      %s30 = sadd.s32 1, %s25
      %p31 = scmp.ge.s32.totalorder %s30, 1
      %s32 = scalar_select %p31, 0, %s30
      %s33 = sadd.s32 1, %s24
      %s34 = scalar_select %p31, %s33, %s24
      %p35 = scmp.ge.s32.totalorder %s34, 2
      %s36 = scalar_select %p35, 0, %s34
      %s37 = ssub.s32 %s24, %s36
      %s38 = ssub.s32 %s25, %s32
      %s39 = sor.u32 %s37, %s38
      %p40 = scmp.eq.s32.totalorder %s39, 0
      %s42 = sadd.s32 %s41, 1
      %s43 = scalar_select %p40, %s41, %s42
      %p46 = pneg %p40
      %p47 = scmp.eq.s32.totalorder %s17, 1
      %p48 = por %p46, %p47
      %p49 = scmp.ne.s32.totalorder %s41, %s44
      %p50 = scmp.eq.s32.totalorder %s17, 0
      %p51 = por %p49, %p50
      %p52 = scmp.ne.s32.totalorder %s41, %s44
      %p53 = scmp.eq.s32.totalorder %s22, 1
      %p54 = por %p52, %p53
      %p55 = scmp.ne.s32.totalorder %s44, %s45
      %p56 = scmp.eq.s32.totalorder %s22, 0
      %p57 = por %p55, %p56
      %p58 = scmp.ne.s32.totalorder %s44, %s45
      %p59 = scmp.eq.s32.totalorder %s23, 1
      %p60 = por %p58, %p59
      %p62 = scmp.ne.s32.totalorder %s45, %s61
      %p63 = scmp.eq.s32.totalorder %s23, 0
      %p64 = por %p62, %p63
      %s65 = ssub.s32 %s24, %s36
      %s66 = ssub.s32 %s25, %s32
      %s67 = sor.u32 %s65, %s66
      %p68 = scmp.eq.s32.totalorder %s67, 0
      %s70 = sadd.s32 %s69, 1
      %s71 = scalar_select %p68, %s69, %s70
      %p74 = pneg %p68
      %p75 = scmp.eq.s32.totalorder %s17, 1
      %p76 = por %p74, %p75
      %p77 = scmp.ne.s32.totalorder %s69, %s72
      %p78 = scmp.eq.s32.totalorder %s17, 0
      %p79 = por %p77, %p78
      %p80 = scmp.ne.s32.totalorder %s69, %s72
      %p81 = scmp.eq.s32.totalorder %s22, 1
      %p82 = por %p80, %p81
      %p83 = scmp.ne.s32.totalorder %s72, %s73
      %p84 = scmp.eq.s32.totalorder %s22, 0
      %p85 = por %p83, %p84
      %p86 = scmp.ne.s32.totalorder %s72, %s73
      %p87 = scmp.eq.s32.totalorder %s23, 1
      %p88 = por %p86, %p87
      %p90 = scmp.ne.s32.totalorder %s73, %s89
      %p91 = scmp.eq.s32.totalorder %s23, 0
      %p92 = por %p90, %p91
      %s93 = ssub.s32 %s24, %s36
      %p94 = scmp.eq.s32.totalorder %s93, 0
      %s96 = sadd.s32 %s95, 1
      %s97 = scalar_select %p94, %s95, %s96
      %p100 = pneg %p94
      %p101 = scmp.eq.s32.totalorder %s17, 1
      %p102 = por %p100, %p101
      %p103 = scmp.ne.s32.totalorder %s95, %s98
      %p104 = scmp.eq.s32.totalorder %s17, 0
      %p105 = por %p103, %p104
      %p106 = scmp.ne.s32.totalorder %s95, %s98
      %p107 = scmp.eq.s32.totalorder %s22, 1
      %p108 = por %p106, %p107
      %p109 = scmp.ne.s32.totalorder %s98, %s99
      %p110 = scmp.eq.s32.totalorder %s22, 0
      %p111 = por %p109, %p110
      %p112 = scmp.ne.s32.totalorder %s98, %s99
      %p113 = scmp.eq.s32.totalorder %s23, 1
      %p114 = por %p112, %p113
      %p116 = scmp.ne.s32.totalorder %s99, %s115
      %p117 = scmp.eq.s32.totalorder %s23, 0
      %p118 = por %p116, %p117
      %p119 = scmp.le.s32.totalorder 1, %s17
      %p120 = scmp.lt.s32.totalorder %s17, 3
      %p121 = pnand %p119, %p120
      %p122 = pneg %p121
      // Predicated region
      $region9: #{tpu_custom_call.1} parent=5 // pred_check
        _
      $region10: #{tpu_custom_call.1} parent=5 // pred_check_branch
        %124 = sbr.rel (%p121) target = $region12
      $region11: #{tpu_custom_call.1} parent=5 // pred_region
        %s125 = ssub.s32 %s17, 1
      $region12: #{tpu_custom_call.1} parent=5 // pred_fallthru
        _
      %p126 = scmp.lt.s32.totalorder %s17, 2
      // Predicated region
      $region13: #{tpu_custom_call.1} parent=5 // pred_check
        %p127 = pneg %p126
      $region14: #{tpu_custom_call.1} parent=5 // pred_check_branch
        %129 = sbr.rel (%p127) target = $region16
      $region15: #{tpu_custom_call.1} parent=5 // pred_region
        // Predicated region
        $region17: #{tpu_custom_call.1} parent=15 // pred_check
          %p130 = pneg %p51
        $region18: #{tpu_custom_call.1} parent=15 // pred_check_branch
          %132 = sbr.rel (%p130) target = $region20
        $region19: #{tpu_custom_call.1} parent=15 // pred_region
          %s133 = sand.u32 %s41, 1
          %s134 = scalar_lea.sflag [#allocation5], %s133
          %s135 = sand.u32 %s41, 1
          %s136 = smul.addr %s135, 8
          %s137 = scalar_lea.vmem [#allocation4], %s136
          %s139 = ssub.s32 128, 128
          %140 = vsyncadd %s134, %s139
          %s141 = sadd.s32 %s25, %s24
          %s142 = smul.addr %s141, 128
          %s143 = scalar_lea.hbm %s0, %s142
          %s145 = sshll.u32 %s137, 4
          %s146 = int_to_ptr.vmem [resolvable:$true] %s145
          %148 = dma.hbm_to_vmem [thread:$0]  %s143, 128, %s146, %s134
        $region20: #{tpu_custom_call.1} parent=15 // pred_fallthru
          _
        // Predicated region
        $region21: #{tpu_custom_call.1} parent=15 // pred_check
          %p149 = pneg %p79
        $region22: #{tpu_custom_call.1} parent=15 // pred_check_branch
          %151 = sbr.rel (%p149) target = $region24
        $region23: #{tpu_custom_call.1} parent=15 // pred_region
          %s152 = sand.u32 %s69, 1
          %s153 = scalar_lea.sflag [#allocation8], %s152
          %s154 = sand.u32 %s69, 1
          %s155 = smul.addr %s154, 8
          %s156 = scalar_lea.vmem [#allocation7], %s155
          %s158 = ssub.s32 128, 128
          %159 = vsyncadd %s153, %s158
          %s160 = sadd.s32 %s25, %s24
          %s161 = smul.addr %s160, 128
          %s162 = scalar_lea.hbm %s1, %s161
          %s164 = sshll.u32 %s156, 4
          %s165 = int_to_ptr.vmem [resolvable:$true] %s164
          %167 = dma.hbm_to_vmem [thread:$0]  %s162, 128, %s165, %s153
        $region24: #{tpu_custom_call.1} parent=15 // pred_fallthru
          _
      $region16: #{tpu_custom_call.1} parent=5 // pred_fallthru
        _
      %p168 = scmp.le.s32.totalorder 1, %s17
      %p169 = scmp.lt.s32.totalorder %s17, 3
      %p170 = pnand %p168, %p169
      %p171 = pneg %p170
      // Predicated region
      $region25: #{tpu_custom_call.1} parent=5 // pred_check
        _
      $region26: #{tpu_custom_call.1} parent=5 // pred_check_branch
        %173 = sbr.rel (%p170) target = $region28
      $region27: #{tpu_custom_call.1} parent=5 // pred_region
        %s174 = ssub.s32 %s17, 1
        %s175 = sand.u32 %s44, 1
        %s176 = scalar_lea.sflag [#allocation5], %s175
        %s177 = sand.u32 %s44, 1
        %s178 = smul.addr %s177, 8
        %s179 = scalar_lea.vmem [#allocation4], %s178
        // Predicated region
        $region29: #{tpu_custom_call.1} parent=27 // pred_check
          %p180 = pneg %p57
        $region30: #{tpu_custom_call.1} parent=27 // pred_check_branch
          %182 = sbr.rel (%p180) target = $region32
        $region31: #{tpu_custom_call.1} parent=27 // pred_region
          %183 = dma.done %s176, 128
        $region32: #{tpu_custom_call.1} parent=27 // pred_fallthru
          _
        %s184 = sand.u32 %s72, 1
        %s185 = scalar_lea.sflag [#allocation8], %s184
        %s186 = sand.u32 %s72, 1
        %s187 = smul.addr %s186, 8
        %s188 = scalar_lea.vmem [#allocation7], %s187
        // Predicated region
        $region33: #{tpu_custom_call.1} parent=27 // pred_check
          %p189 = pneg %p85
        $region34: #{tpu_custom_call.1} parent=27 // pred_check_branch
          %191 = sbr.rel (%p189) target = $region36
        $region35: #{tpu_custom_call.1} parent=27 // pred_region
          %192 = dma.done %s185, 128
        $region36: #{tpu_custom_call.1} parent=27 // pred_fallthru
          _
        %s193 = sand.u32 %s44, 1
        %s194 = scalar_lea.sflag [#allocation5], %s193
        %s195 = sand.u32 %s44, 1
        %s196 = smul.addr %s195, 8
        %s197 = scalar_lea.vmem [#allocation4], %s196
        %p198 = pneg %p57
        %p199 = pneg %p54
        %s200 = sand.u32 %s72, 1
        %s201 = scalar_lea.sflag [#allocation8], %s200
        %s202 = sand.u32 %s72, 1
        %s203 = smul.addr %s202, 8
        %s204 = scalar_lea.vmem [#allocation7], %s203
        %p205 = pneg %p85
        %p206 = pneg %p82
        %p207 = pneg %p111
        %p208 = pneg %p108
        %s209 = sand.u32 %s98, 1
        %s210 = scalar_lea.sflag [#allocation6], %s209
        %s211 = sand.u32 %s98, 1
        %s212 = scalar_lea.vmem [#allocation9], %s211
        %p213 = scmp.eq.s32.totalorder %s27, 0
        // Predicated region
        $region37: #{tpu_custom_call.1} parent=27 // pred_check
          %p214 = pneg %p213
        $region38: #{tpu_custom_call.1} parent=27 // pred_check_branch
          %216 = sbr.rel (%p214) target = $region40
        $region39: #{tpu_custom_call.1} parent=27 // pred_region
          %217 = vst [vmem:[#allocation2] sm:$0x1] 0.0
          %218 = vst [vmem:[#allocation3] sm:$0x1] 0.0
        $region40: #{tpu_custom_call.1} parent=27 // pred_fallthru
          _
        %v219 = vld [vmem:[%s179] sm:$0xff]
        %v220 = vld [vmem:[%s188] sm:$0xff]
        %v221 = vld [vmem:[#allocation2] sm:$0x1]
        %v222 = vmul.f32 %v219, %v220
        %v223 = vrot.slane %v222, 4
        %v224 = vadd.f32 %v222, %v223
        %v225 = vrot.slane %v224, 2
        %v226 = vadd.f32 %v224, %v225
        %v227 = vrot.slane %v226, 1
        %v228 = vadd.f32 %v226, %v227
        %v229 = vadd.f32 %v221, %v228
        %230 = vst [vmem:[#allocation2] sm:$0x1] %v229
        %v231 = vld [vmem:[#allocation3] sm:$0x1]
        %v232 = vrot.slane %v219, 4
        %v233 = vadd.f32 %v219, %v232
        %v234 = vrot.slane %v233, 2
        %v235 = vadd.f32 %v233, %v234
        %v236 = vrot.slane %v235, 1
        %v237 = vadd.f32 %v235, %v236
        %v238 = vrot.slane %v220, 4
        %v239 = vadd.f32 %v220, %v238
        %v240 = vrot.slane %v239, 2
        %v241 = vadd.f32 %v239, %v240
        %v242 = vrot.slane %v241, 1
        %v243 = vadd.f32 %v241, %v242
        %v244 = vadd.f32 %v237, %v243
        %v245 = vadd.f32 %v231, %v244
        %246 = vst [vmem:[#allocation3] sm:$0x1] %v245
        // Predicated region
        $region41: #{tpu_custom_call.1} parent=27 // pred_check
          %p247 = pneg %p213
        $region42: #{tpu_custom_call.1} parent=27 // pred_check_branch
          %249 = sbr.rel (%p247) target = $region44
        $region43: #{tpu_custom_call.1} parent=27 // pred_region
          %v250 = vld [vmem:[#allocation2] sm:$0x1]
          %vm251 = vcmask 1040384
          %v252 = vsel %vm251, %v250, 0.0
          %253 = vadd.xlane.f32.xlu0 %v252
          %v254 = vpop.xlane.xlu0 %253
          %v255 = vrot.slane %v254, 4
          %v256 = vadd.f32 %v254, %v255
          %v257 = vrot.slane %v256, 2
          %v258 = vadd.f32 %v256, %v257
          %v259 = vrot.slane %v258, 1
          %v260 = vadd.f32 %v258, %v259
          %v261 = vld [vmem:[#allocation3] sm:$0x1]
          %v262 = vsel %vm251, %v261, 0.0
          %263 = vadd.xlane.f32.xlu0 %v262
          %v264 = vpop.xlane.xlu0 %263
          %v265 = vrot.slane %v264, 4
          %v266 = vadd.f32 %v264, %v265
          %v267 = vrot.slane %v266, 2
          %v268 = vadd.f32 %v266, %v267
          %v269 = vrot.slane %v268, 1
          %v270 = vadd.f32 %v268, %v269
          %v271 = vmul.f32 %v260, 2.0
          %v272 = vadd.f32 %v271, 100.0
          %v273 = vadd.f32 %v270, 100.0
          %v274 = vrcp.pop %v273
          %v275 = vmul.f32 %v272, %v274
          %v276 = vsub.f32 1.0, %v275
          %277 = vst [vmem:[%s212] sm:$0x1] %v276
        $region44: #{tpu_custom_call.1} parent=27 // pred_fallthru
          _
        %s278 = sand.u32 %s98, 1
        %s279 = scalar_lea.sflag [#allocation6], %s278
        %s280 = sand.u32 %s98, 1
        %s281 = scalar_lea.vmem [#allocation9], %s280
        // Predicated region
        $region45: #{tpu_custom_call.1} parent=27 // pred_check
          %p282 = pneg %p108
        $region46: #{tpu_custom_call.1} parent=27 // pred_check_branch
          %284 = sbr.rel (%p282) target = $region48
        $region47: #{tpu_custom_call.1} parent=27 // pred_region
          %s286 = ssub.s32 16, 16
          %287 = vsyncadd %s279, %s286
          %s288 = smul.addr %s26, 16
          %s289 = scalar_lea.hbm %s2, %s288
          %s291 = sshll.u32 %s281, 4
          %s292 = int_to_ptr.vmem [resolvable:$true] %s291
          %294 = dma.vmem_to_hbm [thread:$0]  %s292, 16, %s289, %s279
        $region48: #{tpu_custom_call.1} parent=27 // pred_fallthru
          _
      $region28: #{tpu_custom_call.1} parent=5 // pred_fallthru
        _
      %p295 = scmp.le.s32.totalorder 2, %s17
      // Predicated region
      $region49: #{tpu_custom_call.1} parent=5 // pred_check
        %p296 = pneg %p295
      $region50: #{tpu_custom_call.1} parent=5 // pred_check_branch
        %298 = sbr.rel (%p296) target = $region52
      $region51: #{tpu_custom_call.1} parent=5 // pred_region
        %s299 = ssub.s32 %s17, 2
        // Predicated region
        $region53: #{tpu_custom_call.1} parent=51 // pred_check
          %p300 = pneg %p114
        $region54: #{tpu_custom_call.1} parent=51 // pred_check_branch
          %302 = sbr.rel (%p300) target = $region56
        $region55: #{tpu_custom_call.1} parent=51 // pred_region
          %s303 = sand.u32 %s99, 1
          %s304 = scalar_lea.sflag [#allocation6], %s303
          %s305 = sand.u32 %s99, 1
          %s306 = scalar_lea.vmem [#allocation9], %s305
          %307 = dma.done %s304, 16
        $region56: #{tpu_custom_call.1} parent=51 // pred_fallthru
          _
      $region52: #{tpu_custom_call.1} parent=5 // pred_fallthru
        _
    $region6: #{tpu_custom_call.1} parent=1 // loop_footer
      %s21 = sadd.s32 1, %s17
    $region7: #{tpu_custom_call.1} parent=1 // loop_footer_branch
      %16 = sbr.rel target = $region3
    $region8: #{tpu_custom_call.1} parent=1 // loop_exit
      _
    %308 = vsyncpa [#allocation5], 1
    %s309 = scalar_lea.sflag [#allocation5], 1
    %310 = vsyncpa %s309, 1
    %311 = vsyncpa [#allocation8], 1
    %s312 = scalar_lea.sflag [#allocation8], 1
    %313 = vsyncpa %s312, 1
    %314 = vsyncpa [#allocation6], 1
    %s315 = scalar_lea.sflag [#allocation6], 1
    %316 = vsyncpa %s315, 1

</llo_original>
